<compile_context>
chip_gen: v5e
topology: v5e:2x2
jax: 0.10.0
libtpu: 0.0.40
codegen_flags: <defaults>
</compile_context>

<pallas_src>
import functools
from typing import NamedTuple

import jax
import jax.numpy as jnp
from jax.experimental import pallas as pl
from jax.experimental.pallas import tpu as pltpu

LN_EPS = 1e-5  # PyTorch nn.LayerNorm default eps


def _round_up(x, m):
    return ((x + m - 1) // m) * m


def _tpu_vmem_info():
    """(vmem bytes per core, is-multi-TensorCore chip) with safe fallbacks."""
    vmem_cap = 128 * 1024 * 1024
    try:
        info = pltpu.get_tpu_info()
        vmem_cap = int(getattr(info, "vmem_capacity_bytes", vmem_cap))
    except Exception:
        pass
    # v7x exposes 64 MiB per TensorCore and has 2 TCs/chip; v5e/v6e are 128 MiB,
    # single TC.  (Megacore v4/v5p parts are treated as single-TC here, which only
    # skips the forced 2-way grid split -- never a correctness issue.)
    multi_tc = vmem_cap <= 96 * 1024 * 1024
    return vmem_cap, multi_tc


class PrenormParams(NamedTuple):
    gamma2d: jax.Array  # (1, c_pad)
    beta2d: jax.Array   # (1, c_pad)
    wT2d: jax.Array     # (c_pad, c_pad)  == W.T (C_in x C_out), zero padded
    b2d: jax.Array      # (1, c_pad)
    dim: int            # real channel count


def prepare_prenorm_params(gamma, beta, w, b, *, matmul_dtype=None):
    """Lay out LayerNorm / Linear parameters for the kernel.

    Call ONCE per layer and cache the result: doing the transpose + pad inside the
    per-call path costs an extra HBM read+write of the weight on every forward.
      gamma, beta, b: (dim,)    w: (dim_out, dim_in)  (PyTorch Linear layout)
    """
    dim = w.shape[-1]
    c_pad = dim if dim % 128 == 0 else _round_up(dim, 128)
    pad = c_pad - dim
    wT = jnp.asarray(w).T  # (C_in, C_out) so the kernel computes y @ W.T
    if matmul_dtype is not None:
        wT = wT.astype(matmul_dtype)
    if pad:  # zero pads keep padded lanes inert
        wT = jnp.pad(wT, ((0, pad), (0, pad)))
        gamma = jnp.pad(gamma, (0, pad))
        beta = jnp.pad(beta, (0, pad))
        b = jnp.pad(b, (0, pad))
    return PrenormParams(gamma.reshape(1, c_pad), beta.reshape(1, c_pad),
                         wT, b.reshape(1, c_pad), dim)


def _prenorm_residual_kernel(x_ref, gamma_ref, beta_ref, w_ref, b_ref, o_ref,
                             *, c_real, c_pad, eps, compute_dtype):
    # x_ref: (T, Cp)   gamma/beta/b: (1, Cp)   w: (Cp, Cp)  (Cin x Cout, zero-padded)
    x = x_ref[...].astype(jnp.float32)

    # --- LayerNorm over the (real) channel axis --------------------------------
    inv_c = jnp.float32(1.0 / c_real)
    mu = jnp.sum(x, axis=-1, keepdims=True) * inv_c      # zero-padded lanes add 0
    xc = x - mu                                          # last use of the f32 x copy
    if c_pad != c_real:
        lane = jax.lax.broadcasted_iota(jnp.int32, (1, c_pad), 1)
        xc = jnp.where(lane < c_real, xc, 0.0)           # keep pad lanes out of var
    var = jnp.sum(xc * xc, axis=-1, keepdims=True) * inv_c
    y = xc * jax.lax.rsqrt(var + eps)                    # EUP rsqrt (free slot)
    y = y * gamma_ref[...].astype(jnp.float32) + beta_ref[...].astype(jnp.float32)

    # --- fn: dense projection (1x1 conv) on the MXU -----------------------------
    out = jnp.dot(y.astype(compute_dtype), w_ref[...].astype(compute_dtype),
                  preferred_element_type=jnp.float32)
    out = out + b_ref[...].astype(jnp.float32)

    # --- residual: re-read x so no f32 copy of the tile stayed live across the
    #     matmul (cuts spill traffic in the post-MXU epilogue) -------------------
    o_ref[...] = (out + x_ref[...].astype(jnp.float32)).astype(o_ref.dtype)


def prenorm_residual_dense(x, params: PrenormParams, *, tile_rows=512,
                           eps=LN_EPS, matmul_dtype=None):
    """PreNormResidual with fn = Linear(dim, dim): fn(LayerNorm(x)) + x.

    x: (..., dim) channel-last (the native layout implied by nn.LayerNorm(dim)).
    params: output of prepare_prenorm_params (cache it across calls).
    matmul_dtype: override MXU operand dtype (e.g. jnp.bfloat16 on v5e even for
        f32 inputs); LayerNorm stats and accumulation stay f32.
    """
    orig_shape = x.shape
    dim = params.dim
    assert orig_shape[-1] == dim, (orig_shape, dim)
    rows = 1
    for s in orig_shape[:-1]:
        rows *= s
    c_pad = params.wT2d.shape[0]

    itemsize = jnp.dtype(x.dtype).itemsize
    w_itemsize = jnp.dtype(params.wT2d.dtype).itemsize

    # --- generation-aware VMEM budgets ------------------------------------------
    vmem_cap, multi_tc = _tpu_vmem_info()
    vmem_limit = min((vmem_cap * 3) // 4, 96 * 1024 * 1024)  # 48 MiB v7x / 96 MiB v5e,v6e
    tile_budget = (vmem_limit * 17) // 20                     # ~85% of the limit

    # --- row tile (main tuning knob), aligned to the dtype's sublane packing -----
    row_align = 8 * max(1, 4 // itemsize)   # 8 f32, 16 bf16, 32 int8/fp8
    t = min(tile_rows, max(rows, row_align))
    t = max(row_align, (t // row_align) * row_align)

    def _vmem_est(tr):
        return (2 * 2 * tr * c_pad * itemsize     # double-buffered x and out tiles
                + c_pad * c_pad * w_itemsize      # weight (Buffered(1), resident)
                + 3 * c_pad * 4                   # gamma / beta / bias (Buffered(1))
                + 3 * tr * c_pad * 4)             # live f32 intermediates in the body

    while t > row_align and _vmem_est(t) > tile_budget:
        t = max(row_align, (t // 2 // row_align) * row_align)

    if multi_tc and rows > row_align and rows <= t:
        # keep >= 2 grid steps so "parallel" can shard across the 2 v7x TensorCores
        t = max(row_align, _round_up((rows + 1) // 2, row_align))

    grid = (pl.cdiv(rows, t),)

    # --- operands: no row padding (ragged last block handled by Pallas boundary
    #     masking); pad the channel axis only when dim is not lane aligned --------
    x2d = x.reshape(rows, dim)
    if c_pad != dim:
        x2d = jnp.pad(x2d, ((0, 0), (0, c_pad - dim)))

    if matmul_dtype is None:
        compute_dtype = jnp.bfloat16 if x.dtype == jnp.bfloat16 else jnp.float32
    else:
        compute_dtype = jnp.dtype(matmul_dtype)

    kernel = functools.partial(_prenorm_residual_kernel,
                               c_real=dim, c_pad=c_pad, eps=eps,
                               compute_dtype=compute_dtype)

    cost = pl.CostEstimate(
        flops=2 * rows * c_pad * c_pad + 10 * rows * c_pad,
        transcendentals=rows,
        bytes_accessed=(2 * rows * c_pad * itemsize
                        + c_pad * c_pad * w_itemsize + 3 * c_pad * 4),
    )

    def _const_spec(shape):
        # constant index_map -> no pipelining needed; single-buffer these operands.
        return pl.BlockSpec(shape, lambda i: (0, 0), pipeline_mode=pl.Buffered(1))

    out2d = pl.pallas_call(
        kernel,
        out_shape=jax.ShapeDtypeStruct((rows, c_pad), x.dtype),
        grid_spec=pltpu.PrefetchScalarGridSpec(
            num_scalar_prefetch=0,
            grid=grid,
            in_specs=[
                pl.BlockSpec((t, c_pad), lambda i: (i, 0)),   # x tile (pipelined)
                _const_spec((1, c_pad)),                      # gamma
                _const_spec((1, c_pad)),                      # beta
                _const_spec((c_pad, c_pad)),                  # fn weight (resident)
                _const_spec((1, c_pad)),                      # fn bias
            ],
            out_specs=pl.BlockSpec((t, c_pad), lambda i: (i, 0)),
        ),
        compiler_params=pltpu.CompilerParams(
            dimension_semantics=("parallel",),
            vmem_limit_bytes=int(vmem_limit),
        ),
        cost_estimate=cost,
    )(x2d, params.gamma2d, params.beta2d, params.wT2d, params.b2d)

    if c_pad != dim:
        out2d = out2d[:, :dim]
    return out2d.reshape(orig_shape)


def _reference(x, gamma, beta, w, b, eps=LN_EPS):
    # Pure-JAX reference of the PyTorch forward: fn(LayerNorm(x)) + x.
    xf = x.astype(jnp.float32)
    mu = jnp.mean(xf, axis=-1, keepdims=True)
    var = jnp.mean((xf - mu) ** 2, axis=-1, keepdims=True)
    y = (xf - mu) / jnp.sqrt(var + eps)
    y = y * gamma + beta
    out = jnp.einsum("...i,oi->...o", y, w.astype(jnp.float32),
                     precision=jax.lax.Precision.HIGHEST) + b
    return (out + xf).astype(x.dtype)


if __name__ == "__main__":
    key = jax.random.PRNGKey(0)
    # channel-last, dim already lane aligned (128) -> zero-copy wrapper path;
    # rows = 2*12*12 = 288 with tile_rows=128 gives a ragged last block, which
    # exercises the cdiv-grid / OOB-masked boundary handling.
    B, H, W, C = 2, 12, 12, 128

    kx, kw, kb, kg, kbt = jax.random.split(key, 5)
    x = jax.random.normal(kx, (B, H, W, C), dtype=jnp.float32)

    # LayerNorm params (non-trivial to exercise the affine).
    gamma = 1.0 + 0.1 * jax.random.normal(kg, (C,), dtype=jnp.float32)
    beta = 0.1 * jax.random.normal(kbt, (C,), dtype=jnp.float32)

    # fn = Linear(dim, dim) params.
    w = 0.05 * jax.random.normal(kw, (C, C), dtype=jnp.float32)   # (C_out, C_in)
    b = 0.01 * jax.random.normal(kb, (C,), dtype=jnp.float32)

    params = prepare_prenorm_params(gamma, beta, w, b)   # cache this across calls

    out = jax.block_until_ready(prenorm_residual_dense(x, params, tile_rows=128))
    ref = jax.block_until_ready(_reference(x, gamma, beta, w, b))

    assert out.shape == x.shape
    err = float(jnp.max(jnp.abs(out.astype(jnp.float32) - ref.astype(jnp.float32))))
    assert err < 1e-3, f"mismatch vs reference: max abs err = {err}"

    print("KERNEL_OK")
</pallas_src>

<mosaic_0001>
module attributes {stable_mosaic.version = 11 : i64} {
  func.func @_prenorm_residual_kernel(%arg0: i32, %arg1: memref<128x128xf32, #tpu.memory_space<vmem>>, %arg2: memref<1x128xf32, #tpu.memory_space<vmem>>, %arg3: memref<1x128xf32, #tpu.memory_space<vmem>>, %arg4: memref<128x128xf32, #tpu.memory_space<vmem>>, %arg5: memref<1x128xf32, #tpu.memory_space<vmem>>, %arg6: memref<128x128xf32, #tpu.memory_space<vmem>>) attributes {dimension_semantics = [#tpu.dimension_semantics<parallel>], iteration_bounds = array<i64: 3>, scalar_prefetch = 0 : i64, scratch_operands = 0 : i64, tpu.core_type = #tpu.core_type<tc>, window_params = [{transform_indices = @transform_0, window_bounds = array<i64: 128, 128>}, {pipeline_mode = #tpu.pipeline_mode<synchronous>, transform_indices = @transform_1, window_bounds = array<i64: 1, 128>}, {pipeline_mode = #tpu.pipeline_mode<synchronous>, transform_indices = @transform_2, window_bounds = array<i64: 1, 128>}, {pipeline_mode = #tpu.pipeline_mode<synchronous>, transform_indices = @transform_3, window_bounds = array<i64: 128, 128>}, {pipeline_mode = #tpu.pipeline_mode<synchronous>, transform_indices = @transform_4, window_bounds = array<i64: 1, 128>}, {transform_indices = @transform_5, window_bounds = array<i64: 128, 128>}]} {
    %c0 = arith.constant 0 : index
    %c0_0 = arith.constant 0 : index
    %0 = vector.load %arg1[%c0, %c0_0] : memref<128x128xf32, #tpu.memory_space<vmem>>, vector<128x128xf32>
    %cst = arith.constant dense<0.000000e+00> : vector<128xf32>
    %1 = vector.multi_reduction <add>, %0, %cst [1] : vector<128x128xf32> to vector<128xf32>
    %2 = vector.shape_cast %1 : vector<128xf32> to vector<128x1xf32>
    %cst_1 = arith.constant 7.812500e-03 : f32
    %3 = vector.broadcast %cst_1 : f32 to vector<128x1xf32>
    %4 = arith.mulf %2, %3 : vector<128x1xf32>
    %5 = vector.broadcast %4 : vector<128x1xf32> to vector<128x128xf32>
    %6 = arith.subf %0, %5 : vector<128x128xf32>
    %7 = arith.mulf %6, %6 : vector<128x128xf32>
    %cst_2 = arith.constant dense<0.000000e+00> : vector<128xf32>
    %8 = vector.multi_reduction <add>, %7, %cst_2 [1] : vector<128x128xf32> to vector<128xf32>
    %9 = vector.shape_cast %8 : vector<128xf32> to vector<128x1xf32>
    %cst_3 = arith.constant 7.812500e-03 : f32
    %10 = vector.broadcast %cst_3 : f32 to vector<128x1xf32>
    %11 = arith.mulf %9, %10 : vector<128x1xf32>
    %cst_4 = arith.constant 9.99999974E-6 : f32
    %12 = vector.broadcast %cst_4 : f32 to vector<128x1xf32>
    %13 = arith.addf %11, %12 : vector<128x1xf32>
    %14 = math.rsqrt %13 : vector<128x1xf32>
    %15 = vector.broadcast %14 : vector<128x1xf32> to vector<128x128xf32>
    %16 = arith.mulf %6, %15 : vector<128x128xf32>
    %c0_5 = arith.constant 0 : index
    %c0_6 = arith.constant 0 : index
    %17 = vector.load %arg2[%c0_5, %c0_6] : memref<1x128xf32, #tpu.memory_space<vmem>>, vector<1x128xf32>
    %18 = vector.broadcast %17 : vector<1x128xf32> to vector<128x128xf32>
    %19 = arith.mulf %16, %18 : vector<128x128xf32>
    %c0_7 = arith.constant 0 : index
    %c0_8 = arith.constant 0 : index
    %20 = vector.load %arg3[%c0_7, %c0_8] : memref<1x128xf32, #tpu.memory_space<vmem>>, vector<1x128xf32>
    %21 = vector.broadcast %20 : vector<1x128xf32> to vector<128x128xf32>
    %22 = arith.addf %19, %21 : vector<128x128xf32>
    %c0_9 = arith.constant 0 : index
    %c0_10 = arith.constant 0 : index
    %23 = vector.load %arg4[%c0_9, %c0_10] : memref<128x128xf32, #tpu.memory_space<vmem>>, vector<128x128xf32>
    %cst_11 = arith.constant dense<0.000000e+00> : vector<128x128xf32>
    %24 = tpu.matmul %22, %23, %cst_11 {dimension_numbers = #tpu.dot_dimension_numbers<[1], [0], [0], [1], [0, 0, 1, 1], [], []>} : vector<128x128xf32>, vector<128x128xf32>, vector<128x128xf32> -> vector<128x128xf32>
    %c0_12 = arith.constant 0 : index
    %c0_13 = arith.constant 0 : index
    %25 = vector.load %arg5[%c0_12, %c0_13] : memref<1x128xf32, #tpu.memory_space<vmem>>, vector<1x128xf32>
    %26 = vector.broadcast %25 : vector<1x128xf32> to vector<128x128xf32>
    %27 = arith.addf %24, %26 : vector<128x128xf32>
    %c0_14 = arith.constant 0 : index
    %c0_15 = arith.constant 0 : index
    %28 = vector.load %arg1[%c0_14, %c0_15] : memref<128x128xf32, #tpu.memory_space<vmem>>, vector<128x128xf32>
    %29 = arith.addf %27, %28 : vector<128x128xf32>
    %c0_16 = arith.constant 0 : index
    %c0_17 = arith.constant 0 : index
    %30 = vector.load %arg6[%c0_16, %c0_17] : memref<128x128xf32, #tpu.memory_space<vmem>>, vector<128x128xf32>
    tpu.vector_store %arg6[%c0_16, %c0_17], %29 {strides = array<i32>} : memref<128x128xf32, #tpu.memory_space<vmem>>, vector<128x128xf32>,
    return
  }
  func.func @transform_0(%arg0: i32) -> (i32, i32) {
    %c0_i32 = arith.constant 0 : i32
    %c0_i32_0 = arith.constant 0 : i32
    return %arg0, %c0_i32 : i32, i32
  }
  func.func @transform_1(%arg0: i32) -> (i32, i32) {
    %c0_i32 = arith.constant 0 : i32
    %c0_i32_0 = arith.constant 0 : i32
    %c0_i32_1 = arith.constant 0 : i32
    return %c0_i32, %c0_i32_0 : i32, i32
  }
  func.func @transform_2(%arg0: i32) -> (i32, i32) {
    %c0_i32 = arith.constant 0 : i32
    %c0_i32_0 = arith.constant 0 : i32
    %c0_i32_1 = arith.constant 0 : i32
    return %c0_i32, %c0_i32_0 : i32, i32
  }
  func.func @transform_3(%arg0: i32) -> (i32, i32) {
    %c0_i32 = arith.constant 0 : i32
    %c0_i32_0 = arith.constant 0 : i32
    %c0_i32_1 = arith.constant 0 : i32
    return %c0_i32, %c0_i32_0 : i32, i32
  }
  func.func @transform_4(%arg0: i32) -> (i32, i32) {
    %c0_i32 = arith.constant 0 : i32
    %c0_i32_0 = arith.constant 0 : i32
    %c0_i32_1 = arith.constant 0 : i32
    return %c0_i32, %c0_i32_0 : i32, i32
  }
  func.func @transform_5(%arg0: i32) -> (i32, i32) {
    %c0_i32 = arith.constant 0 : i32
    %c0_i32_0 = arith.constant 0 : i32
    return %arg0, %c0_i32 : i32, i32
  }
}

</mosaic_0001>

<llo_original>
// kernel: tpu_custom_call.1
$region0: #{tpu_custom_call.1}
  #allocation0 [shape = 'u32[]', space=smem, size = 0x4, offset = 0x4, fixed_abs, tag = 'smem constant byte address 0x4 - core index']
  #allocation1 [shape = 'u32[72,128]{1,0:T(1,128)}', space=vmem, size = 0x9000, scoped, tag = 'internal scratch']
  %s0 = inlined_call_operand.hbm [shape: f32[288,128], index: 0, kind: input, shape index: {}]
  %s1 = inlined_call_operand.hbm [shape: f32[1,128], index: 1, kind: input, shape index: {}]
  %s2 = inlined_call_operand.vmem [shape: f32[1,128], index: 2, kind: input, shape index: {}]
  %s3 = inlined_call_operand.hbm [shape: f32[128,128], index: 3, kind: input, shape index: {}]
  %s4 = inlined_call_operand.vmem [shape: f32[1,128], index: 4, kind: input, shape index: {}]
  %s5 = inlined_call_operand.hbm [shape: f32[288,128], index: 5, kind: output, shape index: {}]
  %s6 = sld [smem:[#allocation0]]
  $region65: #{tpu_custom_call.1} parent=0
    _
  %s8 = ssub.s32 1, %s6
  %s9 = scalar_select 0, %s8, %s6
  $region1: #{tpu_custom_call.1} parent=0
    #allocation2 [shape = 'u8[131072]{0}', space=vmem, size = 0x20000, scoped, tag = 'input window, operand 0']
    #allocation3 [shape = 's32[2]{0}', space=sflag, size = 0x8, scoped, tag = 'scoped memory for tpu_custom_call.1']
    #allocation4 [shape = 's32[2]{0}', space=sflag, size = 0x8, scoped, tag = 'scoped memory for tpu_custom_call.1']
    #allocation5 [shape = 'u8[512]{0}', space=vmem, size = 0x400, scoped, tag = 'input window, operand 1, single buffered']
    #allocation6 [shape = 's32[1]{0}', space=sflag, size = 0x4, scoped, tag = 'scoped memory for tpu_custom_call.1']
    #allocation7 [shape = 'u8[65536]{0}', space=vmem, size = 0x10000, scoped, tag = 'input window, operand 3, single buffered']
    #allocation8 [shape = 'u8[131072]{0}', space=vmem, size = 0x20000, scoped, tag = 'output window, operand 0']
    %10 = vsyncpa [#allocation3], 0
    %s11 = scalar_lea.sflag [#allocation3], 1
    %12 = vsyncpa %s11, 0
    %13 = vsyncpa [#allocation6], 0
    %14 = vsyncpa [#allocation4], 0
    %s15 = scalar_lea.sflag [#allocation4], 1
    %16 = vsyncpa %s15, 0
    loop: start=0, step=1, limit=5
    $region2: #{tpu_custom_call.1} parent=1 // loop_pre_header
      _
    $region3: #{tpu_custom_call.1} parent=1 // loop_header
      %s18 = sphi 0, %s22
      %p19 = scmp.ge.s32.totalorder %s18, 5
      %s28 = sphi 0, %s30
      %s31 = sphi 0, %s28
      %s32 = sphi 0, %s31
      %s48 = sphi 0, %s32
      %s52 = sphi 0, %s52
      %s54 = sphi 0, %s52
      %s55 = sphi 0, %s54
      %s69 = sphi 0, %s55
      %s73 = sphi 0, %s73
      %s75 = sphi 0, %s73
      %s76 = sphi 0, %s75
      %s90 = sphi 0, %s76
      %s94 = sphi 0, %s94
      %s96 = sphi 0, %s94
      %s97 = sphi 0, %s96
      %s111 = sphi 0, %s97
      %s115 = sphi 0, %s115
      %s117 = sphi 0, %s115
      %s118 = sphi 0, %s117
      %s132 = sphi 0, %s118
      %s138 = sphi 0, %s140
      %s141 = sphi 0, %s138
      %s142 = sphi 0, %s141
      %s158 = sphi 0, %s142
    $region4: #{tpu_custom_call.1} parent=1 // loop_header_branch
      %21 = sbr.rel (%p19) target = $region8
    $region5: #{tpu_custom_call.1} parent=1 // loop_body
      %s23 = ssub.s32 %s18, 1
      %s24 = ssub.s32 %s18, 2
      %s25 = sadd.s32 %s18, 1
      %s26 = ssub.s32 %s18, %s25
      %p27 = scmp.eq.s32.totalorder %s26, 0
      %s29 = sadd.s32 %s28, 1
      %s30 = scalar_select %p27, %s28, %s29
      %p33 = pneg %p27
      %p34 = scmp.eq.s32.totalorder %s18, 2
      %p35 = por %p33, %p34
      %p36 = scmp.ne.s32.totalorder %s28, %s31
      %p37 = scmp.eq.s32.totalorder %s18, 0
      %p38 = por %p36, %p37
      %p39 = scmp.ne.s32.totalorder %s28, %s31
      %p40 = scmp.eq.s32.totalorder %s23, 2
      %p41 = por %p39, %p40
      %p42 = scmp.ne.s32.totalorder %s31, %s32
      %p43 = scmp.eq.s32.totalorder %s23, 0
      %p44 = por %p42, %p43
      %p45 = scmp.ne.s32.totalorder %s31, %s32
      %p46 = scmp.eq.s32.totalorder %s24, 2
      %p47 = por %p45, %p46
      %p49 = scmp.ne.s32.totalorder %s32, %s48
      %p50 = scmp.eq.s32.totalorder %s24, 0
      %p51 = por %p49, %p50
      %s53 = sadd.s32 %s52, 1
      %p56 = scmp.eq.s32.totalorder %s18, 2
      %p57 = scmp.ne.s32.totalorder %s52, %s54
      %p58 = scmp.eq.s32.totalorder %s18, 0
      %p59 = por %p57, %p58
      %p60 = scmp.ne.s32.totalorder %s52, %s54
      %p61 = scmp.eq.s32.totalorder %s23, 2
      %p62 = por %p60, %p61
      %p63 = scmp.ne.s32.totalorder %s54, %s55
      %p64 = scmp.eq.s32.totalorder %s23, 0
      %p65 = por %p63, %p64
      %p66 = scmp.ne.s32.totalorder %s54, %s55
      %p67 = scmp.eq.s32.totalorder %s24, 2
      %p68 = por %p66, %p67
      %p70 = scmp.ne.s32.totalorder %s55, %s69
      %p71 = scmp.eq.s32.totalorder %s24, 0
      %p72 = por %p70, %p71
      %s74 = sadd.s32 %s73, 1
      %p77 = scmp.eq.s32.totalorder %s18, 2
      %p78 = scmp.ne.s32.totalorder %s73, %s75
      %p79 = scmp.eq.s32.totalorder %s18, 0
      %p80 = por %p78, %p79
      %p81 = scmp.ne.s32.totalorder %s73, %s75
      %p82 = scmp.eq.s32.totalorder %s23, 2
      %p83 = por %p81, %p82
      %p84 = scmp.ne.s32.totalorder %s75, %s76
      %p85 = scmp.eq.s32.totalorder %s23, 0
      %p86 = por %p84, %p85
      %p87 = scmp.ne.s32.totalorder %s75, %s76
      %p88 = scmp.eq.s32.totalorder %s24, 2
      %p89 = por %p87, %p88
      %p91 = scmp.ne.s32.totalorder %s76, %s90
      %p92 = scmp.eq.s32.totalorder %s24, 0
      %p93 = por %p91, %p92
      %s95 = sadd.s32 %s94, 1
      %p98 = scmp.eq.s32.totalorder %s18, 2
      %p99 = scmp.ne.s32.totalorder %s94, %s96
      %p100 = scmp.eq.s32.totalorder %s18, 0
      %p101 = por %p99, %p100
      %p102 = scmp.ne.s32.totalorder %s94, %s96
      %p103 = scmp.eq.s32.totalorder %s23, 2
      %p104 = por %p102, %p103
      %p105 = scmp.ne.s32.totalorder %s96, %s97
      %p106 = scmp.eq.s32.totalorder %s23, 0
      %p107 = por %p105, %p106
      %p108 = scmp.ne.s32.totalorder %s96, %s97
      %p109 = scmp.eq.s32.totalorder %s24, 2
      %p110 = por %p108, %p109
      %p112 = scmp.ne.s32.totalorder %s97, %s111
      %p113 = scmp.eq.s32.totalorder %s24, 0
      %p114 = por %p112, %p113
      %s116 = sadd.s32 %s115, 1
      %p119 = scmp.eq.s32.totalorder %s18, 2
      %p120 = scmp.ne.s32.totalorder %s115, %s117
      %p121 = scmp.eq.s32.totalorder %s18, 0
      %p122 = por %p120, %p121
      %p123 = scmp.ne.s32.totalorder %s115, %s117
      %p124 = scmp.eq.s32.totalorder %s23, 2
      %p125 = por %p123, %p124
      %p126 = scmp.ne.s32.totalorder %s117, %s118
      %p127 = scmp.eq.s32.totalorder %s23, 0
      %p128 = por %p126, %p127
      %p129 = scmp.ne.s32.totalorder %s117, %s118
      %p130 = scmp.eq.s32.totalorder %s24, 2
      %p131 = por %p129, %p130
      %p133 = scmp.ne.s32.totalorder %s118, %s132
      %p134 = scmp.eq.s32.totalorder %s24, 0
      %p135 = por %p133, %p134
      %s136 = ssub.s32 %s18, %s25
      %p137 = scmp.eq.s32.totalorder %s136, 0
      %s139 = sadd.s32 %s138, 1
      %s140 = scalar_select %p137, %s138, %s139
      %p143 = pneg %p137
      %p144 = scmp.eq.s32.totalorder %s18, 2
      %p145 = por %p143, %p144
      %p146 = scmp.ne.s32.totalorder %s138, %s141
      %p147 = scmp.eq.s32.totalorder %s18, 0
      %p148 = por %p146, %p147
      %p149 = scmp.ne.s32.totalorder %s138, %s141
      %p150 = scmp.eq.s32.totalorder %s23, 2
      %p151 = por %p149, %p150
      %p152 = scmp.ne.s32.totalorder %s141, %s142
      %p153 = scmp.eq.s32.totalorder %s23, 0
      %p154 = por %p152, %p153
      %p155 = scmp.ne.s32.totalorder %s141, %s142
      %p156 = scmp.eq.s32.totalorder %s24, 2
      %p157 = por %p155, %p156
      %p159 = scmp.ne.s32.totalorder %s142, %s158
      %p160 = scmp.eq.s32.totalorder %s24, 0
      %p161 = por %p159, %p160
      %p162 = scmp.le.s32.totalorder 1, %s18
      %p163 = scmp.lt.s32.totalorder %s18, 4
      %p164 = pnand %p162, %p163
      %p165 = pneg %p164
      // Predicated region
      $region9: #{tpu_custom_call.1} parent=5 // pred_check
        _
      $region10: #{tpu_custom_call.1} parent=5 // pred_check_branch
        %167 = sbr.rel (%p164) target = $region12
      $region11: #{tpu_custom_call.1} parent=5 // pred_region
        %s168 = ssub.s32 %s18, 1
        // Predicated region
        $region13: #{tpu_custom_call.1} parent=11 // pred_check
          %p169 = pneg %p65
        $region14: #{tpu_custom_call.1} parent=11 // pred_check_branch
          %171 = sbr.rel (%p169) target = $region16
        $region15: #{tpu_custom_call.1} parent=11 // pred_region
          %173 = vsyncadd [#allocation6], 0
          %s175 = sshll.u32 %s1, 4
          %s176 = int_to_ptr.hbm [resolvable:$true] %s175
          %s177 = sshll.u32 [#allocation5], 4
          %s178 = int_to_ptr.vmem [resolvable:$true] %s177
          %180 = dma.hbm_to_vmem [thread:$0]  %s176, 16, %s178, [#allocation6]
        $region16: #{tpu_custom_call.1} parent=11 // pred_fallthru
          _
        // Predicated region
        $region17: #{tpu_custom_call.1} parent=11 // pred_check
          %p181 = pneg %p86
        $region18: #{tpu_custom_call.1} parent=11 // pred_check_branch
          %183 = sbr.rel (%p181) target = $region20
        $region19: #{tpu_custom_call.1} parent=11 // pred_region
          _
        $region20: #{tpu_custom_call.1} parent=11 // pred_fallthru
          _
        // Predicated region
        $region21: #{tpu_custom_call.1} parent=11 // pred_check
          %p184 = pneg %p107
        $region22: #{tpu_custom_call.1} parent=11 // pred_check_branch
          %186 = sbr.rel (%p184) target = $region24
        $region23: #{tpu_custom_call.1} parent=11 // pred_region
          %188 = vsyncadd [#allocation6], 0
          %s189 = sshll.u32 %s3, 4
          %s190 = int_to_ptr.hbm [resolvable:$true] %s189
          %s191 = sshll.u32 [#allocation7], 4
          %s192 = int_to_ptr.vmem [resolvable:$true] %s191
          %197 = dma.hbm_to_vmem [thread:$0]  %s190, 2048, %s192, [#allocation6], 128, 128, 8
        $region24: #{tpu_custom_call.1} parent=11 // pred_fallthru
          _
        // Predicated region
        $region25: #{tpu_custom_call.1} parent=11 // pred_check
          %p198 = pneg %p128
        $region26: #{tpu_custom_call.1} parent=11 // pred_check_branch
          %200 = sbr.rel (%p198) target = $region28
        $region27: #{tpu_custom_call.1} parent=11 // pred_region
          _
        $region28: #{tpu_custom_call.1} parent=11 // pred_fallthru
          _
      $region12: #{tpu_custom_call.1} parent=5 // pred_fallthru
        _
      %p201 = scmp.lt.s32.totalorder %s18, 3
      // Predicated region
      $region29: #{tpu_custom_call.1} parent=5 // pred_check
        %p202 = pneg %p201
      $region30: #{tpu_custom_call.1} parent=5 // pred_check_branch
        %204 = sbr.rel (%p202) target = $region32
      $region31: #{tpu_custom_call.1} parent=5 // pred_region
        // Predicated region
        $region33: #{tpu_custom_call.1} parent=31 // pred_check
          %p205 = pneg %p38
        $region34: #{tpu_custom_call.1} parent=31 // pred_check_branch
          %207 = sbr.rel (%p205) target = $region36
        $region35: #{tpu_custom_call.1} parent=31 // pred_region
          %s208 = sand.u32 %s28, 1
          %s209 = scalar_lea.sflag [#allocation3], %s208
          %s210 = sand.u32 %s28, 1
          %s211 = smul.addr %s210, 128
          %s212 = scalar_lea.vmem [#allocation2], %s211
          %s213 = smul.u32 16, %s18
          %s214 = ssub.s32 36, %s213
          %p215 = scmp.lt.s32.totalorder %s214, 16
          %s216 = scalar_select %p215, %s214, 16
          %s217 = smul.u32 8, %s216
          %s218 = ssub.s32 128, %s217
          %s219 = sshll.u32 %s218, 4
          %220 = vsyncadd %s209, %s219
          %p221 = scmp.ne.s32.totalorder 0, %s217
          %s222 = smul.addr %s213, 8
          %s223 = scalar_lea.hbm %s0, %s222
          %s224 = smul.u32 8, %s216
          %s225 = sshll.u32 %s223, 4
          %s226 = int_to_ptr.hbm [resolvable:$true] %s225
          %s227 = sshll.u32 %s212, 4
          %s228 = int_to_ptr.vmem [resolvable:$true] %s227
          %s229 = sshll.u32 %s224, 4
          %233 = dma.hbm_to_vmem [thread:$0]  (%p221), %s226, %s229, %s228, %s209, 128, 128, 8
        $region36: #{tpu_custom_call.1} parent=31 // pred_fallthru
          _
      $region32: #{tpu_custom_call.1} parent=5 // pred_fallthru
        _
      %p234 = scmp.le.s32.totalorder 1, %s18
      %p235 = scmp.lt.s32.totalorder %s18, 4
      %p236 = pnand %p234, %p235
      %p237 = pneg %p236
      // Predicated region
      $region37: #{tpu_custom_call.1} parent=5 // pred_check
        _
      $region38: #{tpu_custom_call.1} parent=5 // pred_check_branch
        %239 = sbr.rel (%p236) target = $region40
      $region39: #{tpu_custom_call.1} parent=5 // pred_region
        %s240 = ssub.s32 %s18, 1
        %s241 = sand.u32 %s31, 1
        %s242 = scalar_lea.sflag [#allocation3], %s241
        %s243 = sand.u32 %s31, 1
        %s244 = smul.addr %s243, 128
        %s245 = scalar_lea.vmem [#allocation2], %s244
        // Predicated region
        $region41: #{tpu_custom_call.1} parent=39 // pred_check
          %p246 = pneg %p44
        $region42: #{tpu_custom_call.1} parent=39 // pred_check_branch
          %248 = sbr.rel (%p246) target = $region44
        $region43: #{tpu_custom_call.1} parent=39 // pred_region
          %250 = dma.done %s242, 2048
        $region44: #{tpu_custom_call.1} parent=39 // pred_fallthru
          _
        // Predicated region
        $region45: #{tpu_custom_call.1} parent=39 // pred_check
          %p251 = pneg %p65
        $region46: #{tpu_custom_call.1} parent=39 // pred_check_branch
          %253 = sbr.rel (%p251) target = $region48
        $region47: #{tpu_custom_call.1} parent=39 // pred_region
          %255 = dma.done [#allocation6], 16
        $region48: #{tpu_custom_call.1} parent=39 // pred_fallthru
          _
        // Predicated region
        $region49: #{tpu_custom_call.1} parent=39 // pred_check
          %p256 = pneg %p107
        $region50: #{tpu_custom_call.1} parent=39 // pred_check_branch
          %258 = sbr.rel (%p256) target = $region52
        $region51: #{tpu_custom_call.1} parent=39 // pred_region
          %260 = dma.done [#allocation6], 2048
        $region52: #{tpu_custom_call.1} parent=39 // pred_fallthru
          _
        %s261 = sand.u32 %s31, 1
        %s262 = scalar_lea.sflag [#allocation3], %s261
        %s263 = sand.u32 %s31, 1
        %s264 = smul.addr %s263, 128
        %s265 = scalar_lea.vmem [#allocation2], %s264
        %p266 = pneg %p44
        %p267 = pneg %p41
        %p268 = pneg %p65
        %p269 = pneg %p62
        %p270 = pneg %p86
        %p271 = pneg %p83
        %p272 = pneg %p107
        %p273 = pneg %p104
        %p274 = pneg %p128
        %p275 = pneg %p125
        %p276 = pneg %p154
        %p277 = pneg %p151
        %s278 = sand.u32 %s141, 1
        %s279 = scalar_lea.sflag [#allocation4], %s278
        %s280 = sand.u32 %s141, 1
        %s281 = smul.addr %s280, 128
        %s282 = scalar_lea.vmem [#allocation8], %s281
        %s283 = smul.u32 16, %s23
        %s284 = ssub.s32 36, %s283
        %p285 = scmp.lt.s32.totalorder %s284, 16
        %s286 = scalar_select %p285, %s284, 16
        %s287 = smul.u32 8, %s286
        %s288 = smul.u32 16, %s23
        %s289 = ssub.s32 36, %s288
        %p290 = scmp.lt.s32.totalorder %s289, 16
        %s291 = scalar_select %p290, %s289, 16
        %s292 = smul.u32 8, %s291
        %v293 = vld [vmem:[%s245] sm:$0xff]
        %v294 = vld [vmem:[%s245 + $0x8] sm:$0xff]
        %v295 = vld [vmem:[%s245 + $0x10] sm:$0xff]
        %v296 = vld [vmem:[%s245 + $0x18] sm:$0xff]
        %v297 = vld [vmem:[%s245 + $0x20] sm:$0xff]
        %v298 = vld [vmem:[%s245 + $0x28] sm:$0xff]
        %v299 = vld [vmem:[%s245 + $0x30] sm:$0xff]
        %v300 = vld [vmem:[%s245 + $0x38] sm:$0xff]
        %v301 = vld [vmem:[%s245 + $0x40] sm:$0xff]
        %v302 = vld [vmem:[%s245 + $0x48] sm:$0xff]
        %v303 = vld [vmem:[%s245 + $0x50] sm:$0xff]
        %v304 = vld [vmem:[%s245 + $0x58] sm:$0xff]
        %v305 = vld [vmem:[%s245 + $0x60] sm:$0xff]
        %v306 = vld [vmem:[%s245 + $0x68] sm:$0xff]
        %v307 = vld [vmem:[%s245 + $0x70] sm:$0xff]
        %v308 = vld [vmem:[%s245 + $0x78] sm:$0xff]
        %309 = vadd.xlane.f32.xlu0 %v293
        %v310 = vpop.xlane.xlu0 %309
        %311 = vadd.xlane.f32.xlu0 %v294
        %v312 = vpop.xlane.xlu0 %311
        %313 = vadd.xlane.f32.xlu0 %v295
        %v314 = vpop.xlane.xlu0 %313
        %315 = vadd.xlane.f32.xlu0 %v296
        %v316 = vpop.xlane.xlu0 %315
        %317 = vadd.xlane.f32.xlu0 %v297
        %v318 = vpop.xlane.xlu0 %317
        %319 = vadd.xlane.f32.xlu0 %v298
        %v320 = vpop.xlane.xlu0 %319
        %321 = vadd.xlane.f32.xlu0 %v299
        %v322 = vpop.xlane.xlu0 %321
        %323 = vadd.xlane.f32.xlu0 %v300
        %v324 = vpop.xlane.xlu0 %323
        %325 = vadd.xlane.f32.xlu0 %v301
        %v326 = vpop.xlane.xlu0 %325
        %327 = vadd.xlane.f32.xlu0 %v302
        %v328 = vpop.xlane.xlu0 %327
        %329 = vadd.xlane.f32.xlu0 %v303
        %v330 = vpop.xlane.xlu0 %329
        %331 = vadd.xlane.f32.xlu0 %v304
        %v332 = vpop.xlane.xlu0 %331
        %333 = vadd.xlane.f32.xlu0 %v305
        %v334 = vpop.xlane.xlu0 %333
        %335 = vadd.xlane.f32.xlu0 %v306
        %v336 = vpop.xlane.xlu0 %335
        %337 = vadd.xlane.f32.xlu0 %v307
        %v338 = vpop.xlane.xlu0 %337
        %339 = vadd.xlane.f32.xlu0 %v308
        %v340 = vpop.xlane.xlu0 %339
        %v341 = vmul.f32 %v310, 0.0078125
        %v342 = vmul.f32 %v312, 0.0078125
        %v343 = vmul.f32 %v314, 0.0078125
        %v344 = vmul.f32 %v316, 0.0078125
        %v345 = vmul.f32 %v318, 0.0078125
        %v346 = vmul.f32 %v320, 0.0078125
        %v347 = vmul.f32 %v322, 0.0078125
        %v348 = vmul.f32 %v324, 0.0078125
        %v349 = vmul.f32 %v326, 0.0078125
        %v350 = vmul.f32 %v328, 0.0078125
        %v351 = vmul.f32 %v330, 0.0078125
        %v352 = vmul.f32 %v332, 0.0078125
        %v353 = vmul.f32 %v334, 0.0078125
        %v354 = vmul.f32 %v336, 0.0078125
        %v355 = vmul.f32 %v338, 0.0078125
        %v356 = vmul.f32 %v340, 0.0078125
        %v357 = vsub.f32 %v293, %v341
        %v358 = vsub.f32 %v294, %v342
        %v359 = vsub.f32 %v295, %v343
        %v360 = vsub.f32 %v296, %v344
        %v361 = vsub.f32 %v297, %v345
        %v362 = vsub.f32 %v298, %v346
        %v363 = vsub.f32 %v299, %v347
        %v364 = vsub.f32 %v300, %v348
        %v365 = vsub.f32 %v301, %v349
        %v366 = vsub.f32 %v302, %v350
        %v367 = vsub.f32 %v303, %v351
        %v368 = vsub.f32 %v304, %v352
        %v369 = vsub.f32 %v305, %v353
        %v370 = vsub.f32 %v306, %v354
        %v371 = vsub.f32 %v307, %v355
        %v372 = vsub.f32 %v308, %v356
        %v373 = vmul.f32 %v357, %v357
        %v374 = vmul.f32 %v358, %v358
        %v375 = vmul.f32 %v359, %v359
        %v376 = vmul.f32 %v360, %v360
        %v377 = vmul.f32 %v361, %v361
        %v378 = vmul.f32 %v362, %v362
        %v379 = vmul.f32 %v363, %v363
        %v380 = vmul.f32 %v364, %v364
        %v381 = vmul.f32 %v365, %v365
        %v382 = vmul.f32 %v366, %v366
        %v383 = vmul.f32 %v367, %v367
        %v384 = vmul.f32 %v368, %v368
        %v385 = vmul.f32 %v369, %v369
        %v386 = vmul.f32 %v370, %v370
        %v387 = vmul.f32 %v371, %v371
        %v388 = vmul.f32 %v372, %v372
        %389 = vadd.xlane.f32.xlu0 %v373
        %v390 = vpop.xlane.xlu0 %389
        %391 = vadd.xlane.f32.xlu0 %v374
        %v392 = vpop.xlane.xlu0 %391
        %393 = vadd.xlane.f32.xlu0 %v375
        %v394 = vpop.xlane.xlu0 %393
        %395 = vadd.xlane.f32.xlu0 %v376
        %v396 = vpop.xlane.xlu0 %395
        %397 = vadd.xlane.f32.xlu0 %v377
        %v398 = vpop.xlane.xlu0 %397
        %399 = vadd.xlane.f32.xlu0 %v378
        %v400 = vpop.xlane.xlu0 %399
        %401 = vadd.xlane.f32.xlu0 %v379
        %v402 = vpop.xlane.xlu0 %401
        %403 = vadd.xlane.f32.xlu0 %v380
        %v404 = vpop.xlane.xlu0 %403
        %405 = vadd.xlane.f32.xlu0 %v381
        %v406 = vpop.xlane.xlu0 %405
        %407 = vadd.xlane.f32.xlu0 %v382
        %v408 = vpop.xlane.xlu0 %407
        %409 = vadd.xlane.f32.xlu0 %v383
        %v410 = vpop.xlane.xlu0 %409
        %411 = vadd.xlane.f32.xlu0 %v384
        %v412 = vpop.xlane.xlu0 %411
        %413 = vadd.xlane.f32.xlu0 %v385
        %v414 = vpop.xlane.xlu0 %413
        %415 = vadd.xlane.f32.xlu0 %v386
        %v416 = vpop.xlane.xlu0 %415
        %417 = vadd.xlane.f32.xlu0 %v387
        %v418 = vpop.xlane.xlu0 %417
        %419 = vadd.xlane.f32.xlu0 %v388
        %v420 = vpop.xlane.xlu0 %419
        %v421 = vmul.f32 %v390, 0.0078125
        %v422 = vmul.f32 %v392, 0.0078125
        %v423 = vmul.f32 %v394, 0.0078125
        %v424 = vmul.f32 %v396, 0.0078125
        %v425 = vmul.f32 %v398, 0.0078125
        %v426 = vmul.f32 %v400, 0.0078125
        %v427 = vmul.f32 %v402, 0.0078125
        %v428 = vmul.f32 %v404, 0.0078125
        %v429 = vmul.f32 %v406, 0.0078125
        %v430 = vmul.f32 %v408, 0.0078125
        %v431 = vmul.f32 %v410, 0.0078125
        %v432 = vmul.f32 %v412, 0.0078125
        %v433 = vmul.f32 %v414, 0.0078125
        %v434 = vmul.f32 %v416, 0.0078125
        %v435 = vmul.f32 %v418, 0.0078125
        %v436 = vmul.f32 %v420, 0.0078125
        %v437 = vadd.f32 %v421, 1e-05
        %v438 = vadd.f32 %v422, 1e-05
        %v439 = vadd.f32 %v423, 1e-05
        %v440 = vadd.f32 %v424, 1e-05
        %v441 = vadd.f32 %v425, 1e-05
        %v442 = vadd.f32 %v426, 1e-05
        %v443 = vadd.f32 %v427, 1e-05
        %v444 = vadd.f32 %v428, 1e-05
        %v445 = vadd.f32 %v429, 1e-05
        %v446 = vadd.f32 %v430, 1e-05
        %v447 = vadd.f32 %v431, 1e-05
        %v448 = vadd.f32 %v432, 1e-05
        %v449 = vadd.f32 %v433, 1e-05
        %v450 = vadd.f32 %v434, 1e-05
        %v451 = vadd.f32 %v435, 1e-05
        %v452 = vadd.f32 %v436, 1e-05
        %v453 = vrsqrt.pop %v437
        %v454 = vmul.f32 %v453, %v437
        %v455 = vmul.f32 %v454, %v453
        %v456 = vmul.f32 0.5, %v455
        %v457 = vsub.f32 1.5, %v456
        %v458 = vmul.f32 %v453, %v457
        %vm459 = vweird.f32 %v437
        %vm460 = vweird.f32 %v453
        %vm461 = vmor %vm459, %vm460
        %v462 = vsel %vm461, %v453, %v458
        %v463 = vrsqrt.pop %v438
        %v464 = vmul.f32 %v463, %v438
        %v465 = vmul.f32 %v464, %v463
        %v466 = vmul.f32 0.5, %v465
        %v467 = vsub.f32 1.5, %v466
        %v468 = vmul.f32 %v463, %v467
        %vm469 = vweird.f32 %v438
        %vm470 = vweird.f32 %v463
        %vm471 = vmor %vm469, %vm470
        %v472 = vsel %vm471, %v463, %v468
        %v473 = vrsqrt.pop %v439
        %v474 = vmul.f32 %v473, %v439
        %v475 = vmul.f32 %v474, %v473
        %v476 = vmul.f32 0.5, %v475
        %v477 = vsub.f32 1.5, %v476
        %v478 = vmul.f32 %v473, %v477
        %vm479 = vweird.f32 %v439
        %vm480 = vweird.f32 %v473
        %vm481 = vmor %vm479, %vm480
        %v482 = vsel %vm481, %v473, %v478
        %v483 = vrsqrt.pop %v440
        %v484 = vmul.f32 %v483, %v440
        %v485 = vmul.f32 %v484, %v483
        %v486 = vmul.f32 0.5, %v485
        %v487 = vsub.f32 1.5, %v486
        %v488 = vmul.f32 %v483, %v487
        %vm489 = vweird.f32 %v440
        %vm490 = vweird.f32 %v483
        %vm491 = vmor %vm489, %vm490
        %v492 = vsel %vm491, %v483, %v488
        %v493 = vrsqrt.pop %v441
        %v494 = vmul.f32 %v493, %v441
        %v495 = vmul.f32 %v494, %v493
        %v496 = vmul.f32 0.5, %v495
        %v497 = vsub.f32 1.5, %v496
        %v498 = vmul.f32 %v493, %v497
        %vm499 = vweird.f32 %v441
        %vm500 = vweird.f32 %v493
        %vm501 = vmor %vm499, %vm500
        %v502 = vsel %vm501, %v493, %v498
        %v503 = vrsqrt.pop %v442
        %v504 = vmul.f32 %v503, %v442
        %v505 = vmul.f32 %v504, %v503
        %v506 = vmul.f32 0.5, %v505
        %v507 = vsub.f32 1.5, %v506
        %v508 = vmul.f32 %v503, %v507
        %vm509 = vweird.f32 %v442
        %vm510 = vweird.f32 %v503
        %vm511 = vmor %vm509, %vm510
        %v512 = vsel %vm511, %v503, %v508
        %v513 = vrsqrt.pop %v443
        %v514 = vmul.f32 %v513, %v443
        %v515 = vmul.f32 %v514, %v513
        %v516 = vmul.f32 0.5, %v515
        %v517 = vsub.f32 1.5, %v516
        %v518 = vmul.f32 %v513, %v517
        %vm519 = vweird.f32 %v443
        %vm520 = vweird.f32 %v513
        %vm521 = vmor %vm519, %vm520
        %v522 = vsel %vm521, %v513, %v518
        %v523 = vrsqrt.pop %v444
        %v524 = vmul.f32 %v523, %v444
        %v525 = vmul.f32 %v524, %v523
        %v526 = vmul.f32 0.5, %v525
        %v527 = vsub.f32 1.5, %v526
        %v528 = vmul.f32 %v523, %v527
        %vm529 = vweird.f32 %v444
        %vm530 = vweird.f32 %v523
        %vm531 = vmor %vm529, %vm530
        %v532 = vsel %vm531, %v523, %v528
        %v533 = vrsqrt.pop %v445
        %v534 = vmul.f32 %v533, %v445
        %v535 = vmul.f32 %v534, %v533
        %v536 = vmul.f32 0.5, %v535
        %v537 = vsub.f32 1.5, %v536
        %v538 = vmul.f32 %v533, %v537
        %vm539 = vweird.f32 %v445
        %vm540 = vweird.f32 %v533
        %vm541 = vmor %vm539, %vm540
        %v542 = vsel %vm541, %v533, %v538
        %v543 = vrsqrt.pop %v446
        %v544 = vmul.f32 %v543, %v446
        %v545 = vmul.f32 %v544, %v543
        %v546 = vmul.f32 0.5, %v545
        %v547 = vsub.f32 1.5, %v546
        %v548 = vmul.f32 %v543, %v547
        %vm549 = vweird.f32 %v446
        %vm550 = vweird.f32 %v543
        %vm551 = vmor %vm549, %vm550
        %v552 = vsel %vm551, %v543, %v548
        %v553 = vrsqrt.pop %v447
        %v554 = vmul.f32 %v553, %v447
        %v555 = vmul.f32 %v554, %v553
        %v556 = vmul.f32 0.5, %v555
        %v557 = vsub.f32 1.5, %v556
        %v558 = vmul.f32 %v553, %v557
        %vm559 = vweird.f32 %v447
        %vm560 = vweird.f32 %v553
        %vm561 = vmor %vm559, %vm560
        %v562 = vsel %vm561, %v553, %v558
        %v563 = vrsqrt.pop %v448
        %v564 = vmul.f32 %v563, %v448
        %v565 = vmul.f32 %v564, %v563
        %v566 = vmul.f32 0.5, %v565
        %v567 = vsub.f32 1.5, %v566
        %v568 = vmul.f32 %v563, %v567
        %vm569 = vweird.f32 %v448
        %vm570 = vweird.f32 %v563
        %vm571 = vmor %vm569, %vm570
        %v572 = vsel %vm571, %v563, %v568
        %v573 = vrsqrt.pop %v449
        %v574 = vmul.f32 %v573, %v449
        %v575 = vmul.f32 %v574, %v573
        %v576 = vmul.f32 0.5, %v575
        %v577 = vsub.f32 1.5, %v576
        %v578 = vmul.f32 %v573, %v577
        %vm579 = vweird.f32 %v449
        %vm580 = vweird.f32 %v573
        %vm581 = vmor %vm579, %vm580
        %v582 = vsel %vm581, %v573, %v578
        %v583 = vrsqrt.pop %v450
        %v584 = vmul.f32 %v583, %v450
        %v585 = vmul.f32 %v584, %v583
        %v586 = vmul.f32 0.5, %v585
        %v587 = vsub.f32 1.5, %v586
        %v588 = vmul.f32 %v583, %v587
        %vm589 = vweird.f32 %v450
        %vm590 = vweird.f32 %v583
        %vm591 = vmor %vm589, %vm590
        %v592 = vsel %vm591, %v583, %v588
        %v593 = vrsqrt.pop %v451
        %v594 = vmul.f32 %v593, %v451
        %v595 = vmul.f32 %v594, %v593
        %v596 = vmul.f32 0.5, %v595
        %v597 = vsub.f32 1.5, %v596
        %v598 = vmul.f32 %v593, %v597
        %vm599 = vweird.f32 %v451
        %vm600 = vweird.f32 %v593
        %vm601 = vmor %vm599, %vm600
        %v602 = vsel %vm601, %v593, %v598
        %v603 = vrsqrt.pop %v452
        %v604 = vmul.f32 %v603, %v452
        %v605 = vmul.f32 %v604, %v603
        %v606 = vmul.f32 0.5, %v605
        %v607 = vsub.f32 1.5, %v606
        %v608 = vmul.f32 %v603, %v607
        %vm609 = vweird.f32 %v452
        %vm610 = vweird.f32 %v603
        %vm611 = vmor %vm609, %vm610
        %v612 = vsel %vm611, %v603, %v608
        %v613 = vmul.f32 %v357, %v462
        %v614 = vmul.f32 %v358, %v472
        %v615 = vmul.f32 %v359, %v482
        %v616 = vmul.f32 %v360, %v492
        %v617 = vmul.f32 %v361, %v502
        %v618 = vmul.f32 %v362, %v512
        %v619 = vmul.f32 %v363, %v522
        %v620 = vmul.f32 %v364, %v532
        %v621 = vmul.f32 %v365, %v542
        %v622 = vmul.f32 %v366, %v552
        %v623 = vmul.f32 %v367, %v562
        %v624 = vmul.f32 %v368, %v572
        %v625 = vmul.f32 %v369, %v582
        %v626 = vmul.f32 %v370, %v592
        %v627 = vmul.f32 %v371, %v602
        %v628 = vmul.f32 %v372, %v612
        %v629 = vld [vmem:[#allocation5] sm:$0x1]
        %v631 = vperm.slane %v629, 0
        %v633 = vmul.f32 %v613, %v631
        %v634 = vmul.f32 %v614, %v631
        %v635 = vmul.f32 %v615, %v631
        %v636 = vmul.f32 %v616, %v631
        %v637 = vmul.f32 %v617, %v631
        %v638 = vmul.f32 %v618, %v631
        %v639 = vmul.f32 %v619, %v631
        %v640 = vmul.f32 %v620, %v631
        %v641 = vmul.f32 %v621, %v631
        %v642 = vmul.f32 %v622, %v631
        %v643 = vmul.f32 %v623, %v631
        %v644 = vmul.f32 %v624, %v631
        %v645 = vmul.f32 %v625, %v631
        %v646 = vmul.f32 %v626, %v631
        %v647 = vmul.f32 %v627, %v631
        %v648 = vmul.f32 %v628, %v631
        %v649 = vld [vmem:[%s2] sm:$0x1]
        %v651 = vperm.slane %v649, 0
        %v653 = vadd.f32 %v633, %v651
        %v654 = vadd.f32 %v634, %v651
        %v655 = vadd.f32 %v635, %v651
        %v656 = vadd.f32 %v636, %v651
        %v657 = vadd.f32 %v637, %v651
        %v658 = vadd.f32 %v638, %v651
        %v659 = vadd.f32 %v639, %v651
        %v660 = vadd.f32 %v640, %v651
        %v661 = vadd.f32 %v641, %v651
        %v662 = vadd.f32 %v642, %v651
        %v663 = vadd.f32 %v643, %v651
        %v664 = vadd.f32 %v644, %v651
        %v665 = vadd.f32 %v645, %v651
        %v666 = vadd.f32 %v646, %v651
        %v667 = vadd.f32 %v647, %v651
        %v668 = vadd.f32 %v648, %v651
        %v669 = vld [vmem:[#allocation7] sm:$0xff]
        %v670 = vld [vmem:[#allocation7 + $0x8] sm:$0xff]
        %v671 = vld [vmem:[#allocation7 + $0x10] sm:$0xff]
        %v672 = vld [vmem:[#allocation7 + $0x18] sm:$0xff]
        %v673 = vld [vmem:[#allocation7 + $0x20] sm:$0xff]
        %v674 = vld [vmem:[#allocation7 + $0x28] sm:$0xff]
        %v675 = vld [vmem:[#allocation7 + $0x30] sm:$0xff]
        %v676 = vld [vmem:[#allocation7 + $0x38] sm:$0xff]
        %v677 = vld [vmem:[#allocation7 + $0x40] sm:$0xff]
        %v678 = vld [vmem:[#allocation7 + $0x48] sm:$0xff]
        %v679 = vld [vmem:[#allocation7 + $0x50] sm:$0xff]
        %v680 = vld [vmem:[#allocation7 + $0x58] sm:$0xff]
        %v681 = vld [vmem:[#allocation7 + $0x60] sm:$0xff]
        %v682 = vld [vmem:[#allocation7 + $0x68] sm:$0xff]
        %v683 = vld [vmem:[#allocation7 + $0x70] sm:$0xff]
        %v684 = vld [vmem:[#allocation7 + $0x78] sm:$0xff]
        %v685 = vld [vmem:[%s4] sm:$0x1]
        %v687 = vperm.slane %v685, 0
        %689 = vmatpush.msra.mxu0 %v684
        %690 = vmatpush.msra.mxu0 %v683
        %691 = vmatpush.msra.mxu0 %v682
        %692 = vmatpush.msra.mxu0 %v681
        %693 = vmatpush.msra.mxu0 %v680
        %694 = vmatpush.msra.mxu0 %v679
        %695 = vmatpush.msra.mxu0 %v678
        %696 = vmatpush.msra.mxu0 %v677
        %697 = vmatpush.msra.mxu0 %v676
        %698 = vmatpush.msra.mxu0 %v675
        %699 = vmatpush.msra.mxu0 %v674
        %700 = vmatpush.msra.mxu0 %v673
        %701 = vmatpush.msra.mxu0 %v672
        %702 = vmatpush.msra.mxu0 %v671
        %703 = vmatpush.msra.mxu0 %v670
        %704 = vmatpush.msra.mxu0 %v669
        %705 = vmatmul.f32.gmra.mxu0 %v653
        %v706 = vpop.f32.mrf.mxu0
        %v707 = vadd.f32 %v687, %v706
        %708 = vmatmul.f32.gmra.mxu0 %v654
        %v709 = vpop.f32.mrf.mxu0
        %v710 = vadd.f32 %v687, %v709
        %711 = vmatmul.f32.gmra.mxu0 %v655
        %v712 = vpop.f32.mrf.mxu0
        %v713 = vadd.f32 %v687, %v712
        %714 = vmatmul.f32.gmra.mxu0 %v656
        %v715 = vpop.f32.mrf.mxu0
        %v716 = vadd.f32 %v687, %v715
        %717 = vmatmul.f32.gmra.mxu0 %v657
        %v718 = vpop.f32.mrf.mxu0
        %v719 = vadd.f32 %v687, %v718
        %720 = vmatmul.f32.gmra.mxu0 %v658
        %v721 = vpop.f32.mrf.mxu0
        %v722 = vadd.f32 %v687, %v721
        %723 = vmatmul.f32.gmra.mxu0 %v659
        %v724 = vpop.f32.mrf.mxu0
        %v725 = vadd.f32 %v687, %v724
        %726 = vmatmul.f32.gmra.mxu0 %v660
        %v727 = vpop.f32.mrf.mxu0
        %v728 = vadd.f32 %v687, %v727
        %729 = vmatmul.f32.gmra.mxu0 %v661
        %v730 = vpop.f32.mrf.mxu0
        %v731 = vadd.f32 %v687, %v730
        %732 = vmatmul.f32.gmra.mxu0 %v662
        %v733 = vpop.f32.mrf.mxu0
        %v734 = vadd.f32 %v687, %v733
        %735 = vmatmul.f32.gmra.mxu0 %v663
        %v736 = vpop.f32.mrf.mxu0
        %v737 = vadd.f32 %v687, %v736
        %738 = vmatmul.f32.gmra.mxu0 %v664
        %v739 = vpop.f32.mrf.mxu0
        %v740 = vadd.f32 %v687, %v739
        %741 = vmatmul.f32.gmra.mxu0 %v665
        %v742 = vpop.f32.mrf.mxu0
        %v743 = vadd.f32 %v687, %v742
        %744 = vmatmul.f32.gmra.mxu0 %v666
        %v745 = vpop.f32.mrf.mxu0
        %v746 = vadd.f32 %v687, %v745
        %747 = vmatmul.f32.gmra.mxu0 %v667
        %v748 = vpop.f32.mrf.mxu0
        %v749 = vadd.f32 %v687, %v748
        %750 = vmatmul.f32.gmra.mxu0 %v668
        %v751 = vpop.f32.mrf.mxu0
        %v752 = vadd.f32 %v687, %v751
        %753 = vdwg.mxu0
        %v754 = vadd.f32 %v707, %v293
        %v755 = vadd.f32 %v710, %v294
        %v756 = vadd.f32 %v713, %v295
        %v757 = vadd.f32 %v716, %v296
        %v758 = vadd.f32 %v719, %v297
        %v759 = vadd.f32 %v722, %v298
        %v760 = vadd.f32 %v725, %v299
        %v761 = vadd.f32 %v728, %v300
        %v762 = vadd.f32 %v731, %v301
        %v763 = vadd.f32 %v734, %v302
        %v764 = vadd.f32 %v737, %v303
        %v765 = vadd.f32 %v740, %v304
        %v766 = vadd.f32 %v743, %v305
        %v767 = vadd.f32 %v746, %v306
        %v768 = vadd.f32 %v749, %v307
        %v769 = vadd.f32 %v752, %v308
        %770 = vst [vmem:[%s282] sm:$0xff] %v754
        %771 = vst [vmem:[%s282 + $0x8] sm:$0xff] %v755
        %772 = vst [vmem:[%s282 + $0x10] sm:$0xff] %v756
        %773 = vst [vmem:[%s282 + $0x18] sm:$0xff] %v757
        %774 = vst [vmem:[%s282 + $0x20] sm:$0xff] %v758
        %775 = vst [vmem:[%s282 + $0x28] sm:$0xff] %v759
        %776 = vst [vmem:[%s282 + $0x30] sm:$0xff] %v760
        %777 = vst [vmem:[%s282 + $0x38] sm:$0xff] %v761
        %778 = vst [vmem:[%s282 + $0x40] sm:$0xff] %v762
        %779 = vst [vmem:[%s282 + $0x48] sm:$0xff] %v763
        %780 = vst [vmem:[%s282 + $0x50] sm:$0xff] %v764
        %781 = vst [vmem:[%s282 + $0x58] sm:$0xff] %v765
        %782 = vst [vmem:[%s282 + $0x60] sm:$0xff] %v766
        %783 = vst [vmem:[%s282 + $0x68] sm:$0xff] %v767
        %784 = vst [vmem:[%s282 + $0x70] sm:$0xff] %v768
        %785 = vst [vmem:[%s282 + $0x78] sm:$0xff] %v769
        %s786 = sand.u32 %s141, 1
        %s787 = scalar_lea.sflag [#allocation4], %s786
        %s788 = sand.u32 %s141, 1
        %s789 = smul.addr %s788, 128
        %s790 = scalar_lea.vmem [#allocation8], %s789
        // Predicated region
        $region53: #{tpu_custom_call.1} parent=39 // pred_check
          %p791 = pneg %p151
        $region54: #{tpu_custom_call.1} parent=39 // pred_check_branch
          %793 = sbr.rel (%p791) target = $region56
        $region55: #{tpu_custom_call.1} parent=39 // pred_region
          %s794 = smul.u32 16, %s23
          %s795 = ssub.s32 36, %s794
          %p796 = scmp.lt.s32.totalorder %s795, 16
          %s797 = scalar_select %p796, %s795, 16
          %s798 = smul.u32 8, %s797
          %s799 = ssub.s32 128, %s798
          %s800 = sshll.u32 %s799, 4
          %801 = vsyncadd %s787, %s800
          %p802 = scmp.ne.s32.totalorder 0, %s798
          %s803 = smul.addr %s794, 8
          %s804 = scalar_lea.hbm %s5, %s803
          %s805 = smul.u32 8, %s797
          %s806 = sshll.u32 %s790, 4
          %s807 = int_to_ptr.vmem [resolvable:$true] %s806
          %s808 = sshll.u32 %s804, 4
          %s809 = int_to_ptr.hbm [resolvable:$true] %s808
          %s810 = sshll.u32 %s805, 4
          %814 = dma.vmem_to_hbm [thread:$0]  (%p802), %s807, %s810, %s809, %s787, 128, 128, 8
        $region56: #{tpu_custom_call.1} parent=39 // pred_fallthru
          _
      $region40: #{tpu_custom_call.1} parent=5 // pred_fallthru
        _
      %p815 = scmp.le.s32.totalorder 2, %s18
      // Predicated region
      $region57: #{tpu_custom_call.1} parent=5 // pred_check
        %p816 = pneg %p815
      $region58: #{tpu_custom_call.1} parent=5 // pred_check_branch
        %818 = sbr.rel (%p816) target = $region60
      $region59: #{tpu_custom_call.1} parent=5 // pred_region
        %s819 = ssub.s32 %s18, 2
        // Predicated region
        $region61: #{tpu_custom_call.1} parent=59 // pred_check
          %p820 = pneg %p157
        $region62: #{tpu_custom_call.1} parent=59 // pred_check_branch
          %822 = sbr.rel (%p820) target = $region64
        $region63: #{tpu_custom_call.1} parent=59 // pred_region
          %s823 = sand.u32 %s142, 1
          %s824 = scalar_lea.sflag [#allocation4], %s823
          %s825 = sand.u32 %s142, 1
          %s826 = smul.addr %s825, 128
          %s827 = scalar_lea.vmem [#allocation8], %s826
          %829 = dma.done %s824, 2048
        $region64: #{tpu_custom_call.1} parent=59 // pred_fallthru
          _
      $region60: #{tpu_custom_call.1} parent=5 // pred_fallthru
        _
    $region6: #{tpu_custom_call.1} parent=1 // loop_footer
      %s22 = sadd.s32 1, %s18
    $region7: #{tpu_custom_call.1} parent=1 // loop_footer_branch
      %17 = sbr.rel target = $region3
    $region8: #{tpu_custom_call.1} parent=1 // loop_exit
      _
    %830 = vsyncpa [#allocation3], 1
    %s831 = scalar_lea.sflag [#allocation3], 1
    %832 = vsyncpa %s831, 1
    %833 = vsyncpa [#allocation6], 1
    %834 = vsyncpa [#allocation4], 1
    %s835 = scalar_lea.sflag [#allocation4], 1
    %836 = vsyncpa %s835, 1

</llo_original>
